<compile_context>
chip_gen: v5e
topology: v5e:2x2
jax: 0.10.0
libtpu: 0.0.40
codegen_flags: <defaults>
</compile_context>

<pallas_src>
import jax
import jax.numpy as jnp
from jax.experimental import pallas as pl
from jax.experimental.pallas import tpu as pltpu

SEQ_LEN = 204        # T5 branch: nn.Linear(204, 5) -> end_logits length 204
NUM_CLASSES = 5
HIDDEN = 32          # stub backbone hidden size (synthetic)
VOCAB = 64           # stub vocab

K_PAD = 256          # 204 padded to a multiple of 128 lanes (+ room for the bias column)
C_PAD = 128          # 5 classes padded to one full lane group -> unmasked lane-dense stores
BIAS_COL = SEQ_LEN   # padded-activation column 204 carries the constant 1.0 bias term


# ------------------------------ fused Pallas kernel ------------------------------
def fused_forward_kernel(emb_mean_ref, ids_ref, mask_ref, w_ref, o_ref):
    """Fused stub-backbone + classifier (Linear 204 -> 5), one MXU matmul total.

    emb_mean_ref : (VOCAB,)        float32  SMEM  per-token mean over HIDDEN (precomputed)
    ids_ref      : (B, K_PAD)      int32    VMEM  token ids, zero-padded past SEQ_LEN
    mask_ref     : (B, K_PAD)      float32  VMEM  attention mask, zero-padded past SEQ_LEN
    w_ref        : (K_PAD, C_PAD)  bfloat16 VMEM  classifier weight^T, zero-padded;
                                                  row SEQ_LEN holds the bias
    o_ref        : (B, C_PAD)      float32  VMEM  padded logits; valid cols [:NUM_CLASSES]
    """
    ids = ids_ref[...]                                   # (B, K_PAD) int32
    mask = mask_ref[...]                                  # (B, K_PAD) f32

    # Embedding-mean gather done entirely on the VPU: VOCAB-way unrolled
    # compare+select against cheap SMEM scalar reads.  Keeps the MXU (vex slot)
    # free for the single classifier matmul below.
    end = jnp.zeros(ids.shape, dtype=jnp.float32)
    for v in range(VOCAB):                                # static, fully unrolled (64 iters)
        end = jnp.where(ids == v, emb_mean_ref[v], end)

    # Padded positions (>= SEQ_LEN) have mask == 0, so they contribute nothing;
    # column BIAS_COL gets a constant 1.0 that folds the classifier bias into w.
    k_iota = jax.lax.broadcasted_iota(jnp.int32, ids.shape, 1)
    bias_ones = (k_iota == BIAS_COL).astype(jnp.float32)
    x = end * mask + bias_ones                            # (B, K_PAD) f32, all VPU work

    # Single batched classifier matmul: bf16 MXU operands, f32 accumulation,
    # one full-block unmasked store (C_PAD = 128 lanes).
    o_ref[...] = jnp.dot(x.astype(jnp.bfloat16), w_ref[...],
                         preferred_element_type=jnp.float32)


def fused_forward(emb_mean, ids_pad, mask_pad, w_pad):
    """Single pallas_call: no grid, whole-array operands resident in VMEM/SMEM."""
    # TODO(synk): if batch grows beyond a few rows, add a grid over batch with a
    # (TB, K_PAD) block (TB multiple of 8) marked "parallel" so v7x's two
    # TensorCores shard the work and VMEM stays under v7x's 64 MiB budget.
    batch = ids_pad.shape[0]
    vmem = pl.BlockSpec(memory_space=pltpu.MemorySpace.VMEM)
    smem = pl.BlockSpec(memory_space=pltpu.MemorySpace.SMEM)
    return pl.pallas_call(
        fused_forward_kernel,
        out_shape=jax.ShapeDtypeStruct((batch, C_PAD), jnp.float32),
        in_specs=[smem, vmem, vmem, vmem],
        out_specs=vmem,
    )(emb_mean, ids_pad, mask_pad, w_pad)


# ------------------------------ wrapper / param prep ------------------------------
def prepare_params(emb_table, w_t, bias):
    """One-time parameter layout prep (outside the per-call hot path)."""
    emb_mean = emb_table.mean(axis=-1).astype(jnp.float32)          # (VOCAB,)
    w_pad = jnp.zeros((K_PAD, C_PAD), dtype=jnp.float32)
    w_pad = w_pad.at[:SEQ_LEN, :NUM_CLASSES].set(w_t)
    w_pad = w_pad.at[BIAS_COL, :NUM_CLASSES].set(bias)              # bias as an extra K row
    return {"emb_mean": emb_mean, "w_pad": w_pad.astype(jnp.bfloat16)}


@jax.jit
def custom_model_forward(input_ids, attn_mask, params):
    batch = input_ids.shape[0]
    # Pad ids / mask to the lane-aligned K_PAD (mask = 0 past SEQ_LEN, so padded
    # positions contribute nothing).  Tiny; fused by XLA into the same program.
    ids_pad = jnp.zeros((batch, K_PAD), jnp.int32).at[:, :SEQ_LEN].set(input_ids)
    mask_pad = (
        jnp.zeros((batch, K_PAD), jnp.float32)
        .at[:, :SEQ_LEN]
        .set(attn_mask.astype(jnp.float32))
    )
    # TODO(synk): nn.Dropout(0.25)(hidden_states) — its output is discarded in the
    # original forward (and is identity in eval mode), so it is omitted.
    out_pad = fused_forward(params["emb_mean"], ids_pad, mask_pad, params["w_pad"])
    # Original forward returns `self.model` (a module object, untranslatable); we
    # return the classifier output — the only tensor CustomModel itself computes.
    return out_pad[:, :NUM_CLASSES]


# ----------------------------------- main -----------------------------------------
if __name__ == "__main__":
    key = jax.random.PRNGKey(0)
    k_ids, k_emb, k_w, k_b = jax.random.split(key, 4)

    B = 2
    input_ids = jax.random.randint(k_ids, (B, SEQ_LEN), 0, VOCAB, dtype=jnp.int32)
    attn_mask = jnp.ones((B, SEQ_LEN), dtype=jnp.int32)

    emb_table = jax.random.normal(k_emb, (VOCAB, HIDDEN), dtype=jnp.float32) * 0.02
    # nn.Linear(204, 5): weight (5, 204) stored transposed as (204, 5)
    w_t = jax.random.normal(k_w, (SEQ_LEN, NUM_CLASSES), dtype=jnp.float32) * 0.02
    bias = jax.random.normal(k_b, (NUM_CLASSES,), dtype=jnp.float32) * 0.02

    params = prepare_params(emb_table, w_t, bias)
    out = custom_model_forward(input_ids, attn_mask, params)
    out = jax.block_until_ready(out)
    assert out.shape == (B, NUM_CLASSES)

    # --- plain-JAX references of the fused path (stub backbone + Linear 204->5) ---
    end_ref = emb_table.mean(axis=-1)[input_ids] * attn_mask.astype(jnp.float32)  # (B, 204)

    # bf16-aware reference (kernel feeds bf16 operands to the MXU, f32 accumulation)
    x_ref = jnp.concatenate([end_ref, jnp.ones((B, 1), jnp.float32)], axis=1)     # (B, 205)
    w_full = jnp.concatenate([w_t, bias[None, :]], axis=0)                        # (205, 5)
    ref_bf16 = jnp.dot(
        x_ref.astype(jnp.bfloat16).astype(jnp.float32),
        w_full.astype(jnp.bfloat16).astype(jnp.float32),
        precision=jax.lax.Precision.HIGHEST,
    )
    assert jnp.allclose(out, ref_bf16, atol=1e-4, rtol=1e-3), float(
        jnp.max(jnp.abs(out - ref_bf16))
    )

    # looser sanity check against the full-f32 reference (bf16 weight quantization)
    ref_f32 = jnp.dot(end_ref, w_t, precision=jax.lax.Precision.HIGHEST) + bias
    assert jnp.allclose(out, ref_f32, atol=5e-3, rtol=5e-2), float(
        jnp.max(jnp.abs(out - ref_f32))
    )

    print("KERNEL_OK")
</pallas_src>

<mosaic_0001>
module attributes {stable_mosaic.version = 11 : i64} {
  func.func @fused_forward_kernel(%arg0: memref<64xf32, #tpu.memory_space<smem>>, %arg1: memref<2x256xi32, #tpu.memory_space<vmem>>, %arg2: memref<2x256xf32, #tpu.memory_space<vmem>>, %arg3: memref<256x128xbf16, #tpu.memory_space<vmem>>, %arg4: memref<2x128xf32, #tpu.memory_space<vmem>>) attributes {dimension_semantics = [], scalar_prefetch = 0 : i64, scratch_operands = 0 : i64, tpu.core_type = #tpu.core_type<tc>} {
    %c0 = arith.constant 0 : index
    %c0_0 = arith.constant 0 : index
    %0 = vector.load %arg1[%c0, %c0_0] : memref<2x256xi32, #tpu.memory_space<vmem>>, vector<2x256xi32>
    %c0_1 = arith.constant 0 : index
    %c0_2 = arith.constant 0 : index
    %1 = vector.load %arg2[%c0_1, %c0_2] : memref<2x256xf32, #tpu.memory_space<vmem>>, vector<2x256xf32>
    %cst = arith.constant 0.000000e+00 : f32
    %2 = vector.broadcast %cst : f32 to vector<2x256xf32>
    %c0_i32 = arith.constant 0 : i32
    %3 = vector.broadcast %c0_i32 : i32 to vector<2x256xi32>
    %4 = arith.cmpi eq, %0, %3 : vector<2x256xi32>
    %c0_3 = arith.constant 0 : index
    %5 = memref.load %arg0[%c0_3] : memref<64xf32, #tpu.memory_space<smem>>
    %6 = vector.broadcast %5 : f32 to vector<2x256xf32>
    %7 = arith.select %4, %6, %2 : vector<2x256xi1>, vector<2x256xf32>
    %c1_i32 = arith.constant 1 : i32
    %8 = vector.broadcast %c1_i32 : i32 to vector<2x256xi32>
    %9 = arith.cmpi eq, %0, %8 : vector<2x256xi32>
    %c1 = arith.constant 1 : index
    %10 = memref.load %arg0[%c1] : memref<64xf32, #tpu.memory_space<smem>>
    %11 = vector.broadcast %10 : f32 to vector<2x256xf32>
    %12 = arith.select %9, %11, %7 : vector<2x256xi1>, vector<2x256xf32>
    %c2_i32 = arith.constant 2 : i32
    %13 = vector.broadcast %c2_i32 : i32 to vector<2x256xi32>
    %14 = arith.cmpi eq, %0, %13 : vector<2x256xi32>
    %c2 = arith.constant 2 : index
    %15 = memref.load %arg0[%c2] : memref<64xf32, #tpu.memory_space<smem>>
    %16 = vector.broadcast %15 : f32 to vector<2x256xf32>
    %17 = arith.select %14, %16, %12 : vector<2x256xi1>, vector<2x256xf32>
    %c3_i32 = arith.constant 3 : i32
    %18 = vector.broadcast %c3_i32 : i32 to vector<2x256xi32>
    %19 = arith.cmpi eq, %0, %18 : vector<2x256xi32>
    %c3 = arith.constant 3 : index
    %20 = memref.load %arg0[%c3] : memref<64xf32, #tpu.memory_space<smem>>
    %21 = vector.broadcast %20 : f32 to vector<2x256xf32>
    %22 = arith.select %19, %21, %17 : vector<2x256xi1>, vector<2x256xf32>
    %c4_i32 = arith.constant 4 : i32
    %23 = vector.broadcast %c4_i32 : i32 to vector<2x256xi32>
    %24 = arith.cmpi eq, %0, %23 : vector<2x256xi32>
    %c4 = arith.constant 4 : index
    %25 = memref.load %arg0[%c4] : memref<64xf32, #tpu.memory_space<smem>>
    %26 = vector.broadcast %25 : f32 to vector<2x256xf32>
    %27 = arith.select %24, %26, %22 : vector<2x256xi1>, vector<2x256xf32>
    %c5_i32 = arith.constant 5 : i32
    %28 = vector.broadcast %c5_i32 : i32 to vector<2x256xi32>
    %29 = arith.cmpi eq, %0, %28 : vector<2x256xi32>
    %c5 = arith.constant 5 : index
    %30 = memref.load %arg0[%c5] : memref<64xf32, #tpu.memory_space<smem>>
    %31 = vector.broadcast %30 : f32 to vector<2x256xf32>
    %32 = arith.select %29, %31, %27 : vector<2x256xi1>, vector<2x256xf32>
    %c6_i32 = arith.constant 6 : i32
    %33 = vector.broadcast %c6_i32 : i32 to vector<2x256xi32>
    %34 = arith.cmpi eq, %0, %33 : vector<2x256xi32>
    %c6 = arith.constant 6 : index
    %35 = memref.load %arg0[%c6] : memref<64xf32, #tpu.memory_space<smem>>
    %36 = vector.broadcast %35 : f32 to vector<2x256xf32>
    %37 = arith.select %34, %36, %32 : vector<2x256xi1>, vector<2x256xf32>
    %c7_i32 = arith.constant 7 : i32
    %38 = vector.broadcast %c7_i32 : i32 to vector<2x256xi32>
    %39 = arith.cmpi eq, %0, %38 : vector<2x256xi32>
    %c7 = arith.constant 7 : index
    %40 = memref.load %arg0[%c7] : memref<64xf32, #tpu.memory_space<smem>>
    %41 = vector.broadcast %40 : f32 to vector<2x256xf32>
    %42 = arith.select %39, %41, %37 : vector<2x256xi1>, vector<2x256xf32>
    %c8_i32 = arith.constant 8 : i32
    %43 = vector.broadcast %c8_i32 : i32 to vector<2x256xi32>
    %44 = arith.cmpi eq, %0, %43 : vector<2x256xi32>
    %c8 = arith.constant 8 : index
    %45 = memref.load %arg0[%c8] : memref<64xf32, #tpu.memory_space<smem>>
    %46 = vector.broadcast %45 : f32 to vector<2x256xf32>
    %47 = arith.select %44, %46, %42 : vector<2x256xi1>, vector<2x256xf32>
    %c9_i32 = arith.constant 9 : i32
    %48 = vector.broadcast %c9_i32 : i32 to vector<2x256xi32>
    %49 = arith.cmpi eq, %0, %48 : vector<2x256xi32>
    %c9 = arith.constant 9 : index
    %50 = memref.load %arg0[%c9] : memref<64xf32, #tpu.memory_space<smem>>
    %51 = vector.broadcast %50 : f32 to vector<2x256xf32>
    %52 = arith.select %49, %51, %47 : vector<2x256xi1>, vector<2x256xf32>
    %c10_i32 = arith.constant 10 : i32
    %53 = vector.broadcast %c10_i32 : i32 to vector<2x256xi32>
    %54 = arith.cmpi eq, %0, %53 : vector<2x256xi32>
    %c10 = arith.constant 10 : index
    %55 = memref.load %arg0[%c10] : memref<64xf32, #tpu.memory_space<smem>>
    %56 = vector.broadcast %55 : f32 to vector<2x256xf32>
    %57 = arith.select %54, %56, %52 : vector<2x256xi1>, vector<2x256xf32>
    %c11_i32 = arith.constant 11 : i32
    %58 = vector.broadcast %c11_i32 : i32 to vector<2x256xi32>
    %59 = arith.cmpi eq, %0, %58 : vector<2x256xi32>
    %c11 = arith.constant 11 : index
    %60 = memref.load %arg0[%c11] : memref<64xf32, #tpu.memory_space<smem>>
    %61 = vector.broadcast %60 : f32 to vector<2x256xf32>
    %62 = arith.select %59, %61, %57 : vector<2x256xi1>, vector<2x256xf32>
    %c12_i32 = arith.constant 12 : i32
    %63 = vector.broadcast %c12_i32 : i32 to vector<2x256xi32>
    %64 = arith.cmpi eq, %0, %63 : vector<2x256xi32>
    %c12 = arith.constant 12 : index
    %65 = memref.load %arg0[%c12] : memref<64xf32, #tpu.memory_space<smem>>
    %66 = vector.broadcast %65 : f32 to vector<2x256xf32>
    %67 = arith.select %64, %66, %62 : vector<2x256xi1>, vector<2x256xf32>
    %c13_i32 = arith.constant 13 : i32
    %68 = vector.broadcast %c13_i32 : i32 to vector<2x256xi32>
    %69 = arith.cmpi eq, %0, %68 : vector<2x256xi32>
    %c13 = arith.constant 13 : index
    %70 = memref.load %arg0[%c13] : memref<64xf32, #tpu.memory_space<smem>>
    %71 = vector.broadcast %70 : f32 to vector<2x256xf32>
    %72 = arith.select %69, %71, %67 : vector<2x256xi1>, vector<2x256xf32>
    %c14_i32 = arith.constant 14 : i32
    %73 = vector.broadcast %c14_i32 : i32 to vector<2x256xi32>
    %74 = arith.cmpi eq, %0, %73 : vector<2x256xi32>
    %c14 = arith.constant 14 : index
    %75 = memref.load %arg0[%c14] : memref<64xf32, #tpu.memory_space<smem>>
    %76 = vector.broadcast %75 : f32 to vector<2x256xf32>
    %77 = arith.select %74, %76, %72 : vector<2x256xi1>, vector<2x256xf32>
    %c15_i32 = arith.constant 15 : i32
    %78 = vector.broadcast %c15_i32 : i32 to vector<2x256xi32>
    %79 = arith.cmpi eq, %0, %78 : vector<2x256xi32>
    %c15 = arith.constant 15 : index
    %80 = memref.load %arg0[%c15] : memref<64xf32, #tpu.memory_space<smem>>
    %81 = vector.broadcast %80 : f32 to vector<2x256xf32>
    %82 = arith.select %79, %81, %77 : vector<2x256xi1>, vector<2x256xf32>
    %c16_i32 = arith.constant 16 : i32
    %83 = vector.broadcast %c16_i32 : i32 to vector<2x256xi32>
    %84 = arith.cmpi eq, %0, %83 : vector<2x256xi32>
    %c16 = arith.constant 16 : index
    %85 = memref.load %arg0[%c16] : memref<64xf32, #tpu.memory_space<smem>>
    %86 = vector.broadcast %85 : f32 to vector<2x256xf32>
    %87 = arith.select %84, %86, %82 : vector<2x256xi1>, vector<2x256xf32>
    %c17_i32 = arith.constant 17 : i32
    %88 = vector.broadcast %c17_i32 : i32 to vector<2x256xi32>
    %89 = arith.cmpi eq, %0, %88 : vector<2x256xi32>
    %c17 = arith.constant 17 : index
    %90 = memref.load %arg0[%c17] : memref<64xf32, #tpu.memory_space<smem>>
    %91 = vector.broadcast %90 : f32 to vector<2x256xf32>
    %92 = arith.select %89, %91, %87 : vector<2x256xi1>, vector<2x256xf32>
    %c18_i32 = arith.constant 18 : i32
    %93 = vector.broadcast %c18_i32 : i32 to vector<2x256xi32>
    %94 = arith.cmpi eq, %0, %93 : vector<2x256xi32>
    %c18 = arith.constant 18 : index
    %95 = memref.load %arg0[%c18] : memref<64xf32, #tpu.memory_space<smem>>
    %96 = vector.broadcast %95 : f32 to vector<2x256xf32>
    %97 = arith.select %94, %96, %92 : vector<2x256xi1>, vector<2x256xf32>
    %c19_i32 = arith.constant 19 : i32
    %98 = vector.broadcast %c19_i32 : i32 to vector<2x256xi32>
    %99 = arith.cmpi eq, %0, %98 : vector<2x256xi32>
    %c19 = arith.constant 19 : index
    %100 = memref.load %arg0[%c19] : memref<64xf32, #tpu.memory_space<smem>>
    %101 = vector.broadcast %100 : f32 to vector<2x256xf32>
    %102 = arith.select %99, %101, %97 : vector<2x256xi1>, vector<2x256xf32>
    %c20_i32 = arith.constant 20 : i32
    %103 = vector.broadcast %c20_i32 : i32 to vector<2x256xi32>
    %104 = arith.cmpi eq, %0, %103 : vector<2x256xi32>
    %c20 = arith.constant 20 : index
    %105 = memref.load %arg0[%c20] : memref<64xf32, #tpu.memory_space<smem>>
    %106 = vector.broadcast %105 : f32 to vector<2x256xf32>
    %107 = arith.select %104, %106, %102 : vector<2x256xi1>, vector<2x256xf32>
    %c21_i32 = arith.constant 21 : i32
    %108 = vector.broadcast %c21_i32 : i32 to vector<2x256xi32>
    %109 = arith.cmpi eq, %0, %108 : vector<2x256xi32>
    %c21 = arith.constant 21 : index
    %110 = memref.load %arg0[%c21] : memref<64xf32, #tpu.memory_space<smem>>
    %111 = vector.broadcast %110 : f32 to vector<2x256xf32>
    %112 = arith.select %109, %111, %107 : vector<2x256xi1>, vector<2x256xf32>
    %c22_i32 = arith.constant 22 : i32
    %113 = vector.broadcast %c22_i32 : i32 to vector<2x256xi32>
    %114 = arith.cmpi eq, %0, %113 : vector<2x256xi32>
    %c22 = arith.constant 22 : index
    %115 = memref.load %arg0[%c22] : memref<64xf32, #tpu.memory_space<smem>>
    %116 = vector.broadcast %115 : f32 to vector<2x256xf32>
    %117 = arith.select %114, %116, %112 : vector<2x256xi1>, vector<2x256xf32>
    %c23_i32 = arith.constant 23 : i32
    %118 = vector.broadcast %c23_i32 : i32 to vector<2x256xi32>
    %119 = arith.cmpi eq, %0, %118 : vector<2x256xi32>
    %c23 = arith.constant 23 : index
    %120 = memref.load %arg0[%c23] : memref<64xf32, #tpu.memory_space<smem>>
    %121 = vector.broadcast %120 : f32 to vector<2x256xf32>
    %122 = arith.select %119, %121, %117 : vector<2x256xi1>, vector<2x256xf32>
    %c24_i32 = arith.constant 24 : i32
    %123 = vector.broadcast %c24_i32 : i32 to vector<2x256xi32>
    %124 = arith.cmpi eq, %0, %123 : vector<2x256xi32>
    %c24 = arith.constant 24 : index
    %125 = memref.load %arg0[%c24] : memref<64xf32, #tpu.memory_space<smem>>
    %126 = vector.broadcast %125 : f32 to vector<2x256xf32>
    %127 = arith.select %124, %126, %122 : vector<2x256xi1>, vector<2x256xf32>
    %c25_i32 = arith.constant 25 : i32
    %128 = vector.broadcast %c25_i32 : i32 to vector<2x256xi32>
    %129 = arith.cmpi eq, %0, %128 : vector<2x256xi32>
    %c25 = arith.constant 25 : index
    %130 = memref.load %arg0[%c25] : memref<64xf32, #tpu.memory_space<smem>>
    %131 = vector.broadcast %130 : f32 to vector<2x256xf32>
    %132 = arith.select %129, %131, %127 : vector<2x256xi1>, vector<2x256xf32>
    %c26_i32 = arith.constant 26 : i32
    %133 = vector.broadcast %c26_i32 : i32 to vector<2x256xi32>
    %134 = arith.cmpi eq, %0, %133 : vector<2x256xi32>
    %c26 = arith.constant 26 : index
    %135 = memref.load %arg0[%c26] : memref<64xf32, #tpu.memory_space<smem>>
    %136 = vector.broadcast %135 : f32 to vector<2x256xf32>
    %137 = arith.select %134, %136, %132 : vector<2x256xi1>, vector<2x256xf32>
    %c27_i32 = arith.constant 27 : i32
    %138 = vector.broadcast %c27_i32 : i32 to vector<2x256xi32>
    %139 = arith.cmpi eq, %0, %138 : vector<2x256xi32>
    %c27 = arith.constant 27 : index
    %140 = memref.load %arg0[%c27] : memref<64xf32, #tpu.memory_space<smem>>
    %141 = vector.broadcast %140 : f32 to vector<2x256xf32>
    %142 = arith.select %139, %141, %137 : vector<2x256xi1>, vector<2x256xf32>
    %c28_i32 = arith.constant 28 : i32
    %143 = vector.broadcast %c28_i32 : i32 to vector<2x256xi32>
    %144 = arith.cmpi eq, %0, %143 : vector<2x256xi32>
    %c28 = arith.constant 28 : index
    %145 = memref.load %arg0[%c28] : memref<64xf32, #tpu.memory_space<smem>>
    %146 = vector.broadcast %145 : f32 to vector<2x256xf32>
    %147 = arith.select %144, %146, %142 : vector<2x256xi1>, vector<2x256xf32>
    %c29_i32 = arith.constant 29 : i32
    %148 = vector.broadcast %c29_i32 : i32 to vector<2x256xi32>
    %149 = arith.cmpi eq, %0, %148 : vector<2x256xi32>
    %c29 = arith.constant 29 : index
    %150 = memref.load %arg0[%c29] : memref<64xf32, #tpu.memory_space<smem>>
    %151 = vector.broadcast %150 : f32 to vector<2x256xf32>
    %152 = arith.select %149, %151, %147 : vector<2x256xi1>, vector<2x256xf32>
    %c30_i32 = arith.constant 30 : i32
    %153 = vector.broadcast %c30_i32 : i32 to vector<2x256xi32>
    %154 = arith.cmpi eq, %0, %153 : vector<2x256xi32>
    %c30 = arith.constant 30 : index
    %155 = memref.load %arg0[%c30] : memref<64xf32, #tpu.memory_space<smem>>
    %156 = vector.broadcast %155 : f32 to vector<2x256xf32>
    %157 = arith.select %154, %156, %152 : vector<2x256xi1>, vector<2x256xf32>
    %c31_i32 = arith.constant 31 : i32
    %158 = vector.broadcast %c31_i32 : i32 to vector<2x256xi32>
    %159 = arith.cmpi eq, %0, %158 : vector<2x256xi32>
    %c31 = arith.constant 31 : index
    %160 = memref.load %arg0[%c31] : memref<64xf32, #tpu.memory_space<smem>>
    %161 = vector.broadcast %160 : f32 to vector<2x256xf32>
    %162 = arith.select %159, %161, %157 : vector<2x256xi1>, vector<2x256xf32>
    %c32_i32 = arith.constant 32 : i32
    %163 = vector.broadcast %c32_i32 : i32 to vector<2x256xi32>
    %164 = arith.cmpi eq, %0, %163 : vector<2x256xi32>
    %c32 = arith.constant 32 : index
    %165 = memref.load %arg0[%c32] : memref<64xf32, #tpu.memory_space<smem>>
    %166 = vector.broadcast %165 : f32 to vector<2x256xf32>
    %167 = arith.select %164, %166, %162 : vector<2x256xi1>, vector<2x256xf32>
    %c33_i32 = arith.constant 33 : i32
    %168 = vector.broadcast %c33_i32 : i32 to vector<2x256xi32>
    %169 = arith.cmpi eq, %0, %168 : vector<2x256xi32>
    %c33 = arith.constant 33 : index
    %170 = memref.load %arg0[%c33] : memref<64xf32, #tpu.memory_space<smem>>
    %171 = vector.broadcast %170 : f32 to vector<2x256xf32>
    %172 = arith.select %169, %171, %167 : vector<2x256xi1>, vector<2x256xf32>
    %c34_i32 = arith.constant 34 : i32
    %173 = vector.broadcast %c34_i32 : i32 to vector<2x256xi32>
    %174 = arith.cmpi eq, %0, %173 : vector<2x256xi32>
    %c34 = arith.constant 34 : index
    %175 = memref.load %arg0[%c34] : memref<64xf32, #tpu.memory_space<smem>>
    %176 = vector.broadcast %175 : f32 to vector<2x256xf32>
    %177 = arith.select %174, %176, %172 : vector<2x256xi1>, vector<2x256xf32>
    %c35_i32 = arith.constant 35 : i32
    %178 = vector.broadcast %c35_i32 : i32 to vector<2x256xi32>
    %179 = arith.cmpi eq, %0, %178 : vector<2x256xi32>
    %c35 = arith.constant 35 : index
    %180 = memref.load %arg0[%c35] : memref<64xf32, #tpu.memory_space<smem>>
    %181 = vector.broadcast %180 : f32 to vector<2x256xf32>
    %182 = arith.select %179, %181, %177 : vector<2x256xi1>, vector<2x256xf32>
    %c36_i32 = arith.constant 36 : i32
    %183 = vector.broadcast %c36_i32 : i32 to vector<2x256xi32>
    %184 = arith.cmpi eq, %0, %183 : vector<2x256xi32>
    %c36 = arith.constant 36 : index
    %185 = memref.load %arg0[%c36] : memref<64xf32, #tpu.memory_space<smem>>
    %186 = vector.broadcast %185 : f32 to vector<2x256xf32>
    %187 = arith.select %184, %186, %182 : vector<2x256xi1>, vector<2x256xf32>
    %c37_i32 = arith.constant 37 : i32
    %188 = vector.broadcast %c37_i32 : i32 to vector<2x256xi32>
    %189 = arith.cmpi eq, %0, %188 : vector<2x256xi32>
    %c37 = arith.constant 37 : index
    %190 = memref.load %arg0[%c37] : memref<64xf32, #tpu.memory_space<smem>>
    %191 = vector.broadcast %190 : f32 to vector<2x256xf32>
    %192 = arith.select %189, %191, %187 : vector<2x256xi1>, vector<2x256xf32>
    %c38_i32 = arith.constant 38 : i32
    %193 = vector.broadcast %c38_i32 : i32 to vector<2x256xi32>
    %194 = arith.cmpi eq, %0, %193 : vector<2x256xi32>
    %c38 = arith.constant 38 : index
    %195 = memref.load %arg0[%c38] : memref<64xf32, #tpu.memory_space<smem>>
    %196 = vector.broadcast %195 : f32 to vector<2x256xf32>
    %197 = arith.select %194, %196, %192 : vector<2x256xi1>, vector<2x256xf32>
    %c39_i32 = arith.constant 39 : i32
    %198 = vector.broadcast %c39_i32 : i32 to vector<2x256xi32>
    %199 = arith.cmpi eq, %0, %198 : vector<2x256xi32>
    %c39 = arith.constant 39 : index
    %200 = memref.load %arg0[%c39] : memref<64xf32, #tpu.memory_space<smem>>
    %201 = vector.broadcast %200 : f32 to vector<2x256xf32>
    %202 = arith.select %199, %201, %197 : vector<2x256xi1>, vector<2x256xf32>
    %c40_i32 = arith.constant 40 : i32
    %203 = vector.broadcast %c40_i32 : i32 to vector<2x256xi32>
    %204 = arith.cmpi eq, %0, %203 : vector<2x256xi32>
    %c40 = arith.constant 40 : index
    %205 = memref.load %arg0[%c40] : memref<64xf32, #tpu.memory_space<smem>>
    %206 = vector.broadcast %205 : f32 to vector<2x256xf32>
    %207 = arith.select %204, %206, %202 : vector<2x256xi1>, vector<2x256xf32>
    %c41_i32 = arith.constant 41 : i32
    %208 = vector.broadcast %c41_i32 : i32 to vector<2x256xi32>
    %209 = arith.cmpi eq, %0, %208 : vector<2x256xi32>
    %c41 = arith.constant 41 : index
    %210 = memref.load %arg0[%c41] : memref<64xf32, #tpu.memory_space<smem>>
    %211 = vector.broadcast %210 : f32 to vector<2x256xf32>
    %212 = arith.select %209, %211, %207 : vector<2x256xi1>, vector<2x256xf32>
    %c42_i32 = arith.constant 42 : i32
    %213 = vector.broadcast %c42_i32 : i32 to vector<2x256xi32>
    %214 = arith.cmpi eq, %0, %213 : vector<2x256xi32>
    %c42 = arith.constant 42 : index
    %215 = memref.load %arg0[%c42] : memref<64xf32, #tpu.memory_space<smem>>
    %216 = vector.broadcast %215 : f32 to vector<2x256xf32>
    %217 = arith.select %214, %216, %212 : vector<2x256xi1>, vector<2x256xf32>
    %c43_i32 = arith.constant 43 : i32
    %218 = vector.broadcast %c43_i32 : i32 to vector<2x256xi32>
    %219 = arith.cmpi eq, %0, %218 : vector<2x256xi32>
    %c43 = arith.constant 43 : index
    %220 = memref.load %arg0[%c43] : memref<64xf32, #tpu.memory_space<smem>>
    %221 = vector.broadcast %220 : f32 to vector<2x256xf32>
    %222 = arith.select %219, %221, %217 : vector<2x256xi1>, vector<2x256xf32>
    %c44_i32 = arith.constant 44 : i32
    %223 = vector.broadcast %c44_i32 : i32 to vector<2x256xi32>
    %224 = arith.cmpi eq, %0, %223 : vector<2x256xi32>
    %c44 = arith.constant 44 : index
    %225 = memref.load %arg0[%c44] : memref<64xf32, #tpu.memory_space<smem>>
    %226 = vector.broadcast %225 : f32 to vector<2x256xf32>
    %227 = arith.select %224, %226, %222 : vector<2x256xi1>, vector<2x256xf32>
    %c45_i32 = arith.constant 45 : i32
    %228 = vector.broadcast %c45_i32 : i32 to vector<2x256xi32>
    %229 = arith.cmpi eq, %0, %228 : vector<2x256xi32>
    %c45 = arith.constant 45 : index
    %230 = memref.load %arg0[%c45] : memref<64xf32, #tpu.memory_space<smem>>
    %231 = vector.broadcast %230 : f32 to vector<2x256xf32>
    %232 = arith.select %229, %231, %227 : vector<2x256xi1>, vector<2x256xf32>
    %c46_i32 = arith.constant 46 : i32
    %233 = vector.broadcast %c46_i32 : i32 to vector<2x256xi32>
    %234 = arith.cmpi eq, %0, %233 : vector<2x256xi32>
    %c46 = arith.constant 46 : index
    %235 = memref.load %arg0[%c46] : memref<64xf32, #tpu.memory_space<smem>>
    %236 = vector.broadcast %235 : f32 to vector<2x256xf32>
    %237 = arith.select %234, %236, %232 : vector<2x256xi1>, vector<2x256xf32>
    %c47_i32 = arith.constant 47 : i32
    %238 = vector.broadcast %c47_i32 : i32 to vector<2x256xi32>
    %239 = arith.cmpi eq, %0, %238 : vector<2x256xi32>
    %c47 = arith.constant 47 : index
    %240 = memref.load %arg0[%c47] : memref<64xf32, #tpu.memory_space<smem>>
    %241 = vector.broadcast %240 : f32 to vector<2x256xf32>
    %242 = arith.select %239, %241, %237 : vector<2x256xi1>, vector<2x256xf32>
    %c48_i32 = arith.constant 48 : i32
    %243 = vector.broadcast %c48_i32 : i32 to vector<2x256xi32>
    %244 = arith.cmpi eq, %0, %243 : vector<2x256xi32>
    %c48 = arith.constant 48 : index
    %245 = memref.load %arg0[%c48] : memref<64xf32, #tpu.memory_space<smem>>
    %246 = vector.broadcast %245 : f32 to vector<2x256xf32>
    %247 = arith.select %244, %246, %242 : vector<2x256xi1>, vector<2x256xf32>
    %c49_i32 = arith.constant 49 : i32
    %248 = vector.broadcast %c49_i32 : i32 to vector<2x256xi32>
    %249 = arith.cmpi eq, %0, %248 : vector<2x256xi32>
    %c49 = arith.constant 49 : index
    %250 = memref.load %arg0[%c49] : memref<64xf32, #tpu.memory_space<smem>>
    %251 = vector.broadcast %250 : f32 to vector<2x256xf32>
    %252 = arith.select %249, %251, %247 : vector<2x256xi1>, vector<2x256xf32>
    %c50_i32 = arith.constant 50 : i32
    %253 = vector.broadcast %c50_i32 : i32 to vector<2x256xi32>
    %254 = arith.cmpi eq, %0, %253 : vector<2x256xi32>
    %c50 = arith.constant 50 : index
    %255 = memref.load %arg0[%c50] : memref<64xf32, #tpu.memory_space<smem>>
    %256 = vector.broadcast %255 : f32 to vector<2x256xf32>
    %257 = arith.select %254, %256, %252 : vector<2x256xi1>, vector<2x256xf32>
    %c51_i32 = arith.constant 51 : i32
    %258 = vector.broadcast %c51_i32 : i32 to vector<2x256xi32>
    %259 = arith.cmpi eq, %0, %258 : vector<2x256xi32>
    %c51 = arith.constant 51 : index
    %260 = memref.load %arg0[%c51] : memref<64xf32, #tpu.memory_space<smem>>
    %261 = vector.broadcast %260 : f32 to vector<2x256xf32>
    %262 = arith.select %259, %261, %257 : vector<2x256xi1>, vector<2x256xf32>
    %c52_i32 = arith.constant 52 : i32
    %263 = vector.broadcast %c52_i32 : i32 to vector<2x256xi32>
    %264 = arith.cmpi eq, %0, %263 : vector<2x256xi32>
    %c52 = arith.constant 52 : index
    %265 = memref.load %arg0[%c52] : memref<64xf32, #tpu.memory_space<smem>>
    %266 = vector.broadcast %265 : f32 to vector<2x256xf32>
    %267 = arith.select %264, %266, %262 : vector<2x256xi1>, vector<2x256xf32>
    %c53_i32 = arith.constant 53 : i32
    %268 = vector.broadcast %c53_i32 : i32 to vector<2x256xi32>
    %269 = arith.cmpi eq, %0, %268 : vector<2x256xi32>
    %c53 = arith.constant 53 : index
    %270 = memref.load %arg0[%c53] : memref<64xf32, #tpu.memory_space<smem>>
    %271 = vector.broadcast %270 : f32 to vector<2x256xf32>
    %272 = arith.select %269, %271, %267 : vector<2x256xi1>, vector<2x256xf32>
    %c54_i32 = arith.constant 54 : i32
    %273 = vector.broadcast %c54_i32 : i32 to vector<2x256xi32>
    %274 = arith.cmpi eq, %0, %273 : vector<2x256xi32>
    %c54 = arith.constant 54 : index
    %275 = memref.load %arg0[%c54] : memref<64xf32, #tpu.memory_space<smem>>
    %276 = vector.broadcast %275 : f32 to vector<2x256xf32>
    %277 = arith.select %274, %276, %272 : vector<2x256xi1>, vector<2x256xf32>
    %c55_i32 = arith.constant 55 : i32
    %278 = vector.broadcast %c55_i32 : i32 to vector<2x256xi32>
    %279 = arith.cmpi eq, %0, %278 : vector<2x256xi32>
    %c55 = arith.constant 55 : index
    %280 = memref.load %arg0[%c55] : memref<64xf32, #tpu.memory_space<smem>>
    %281 = vector.broadcast %280 : f32 to vector<2x256xf32>
    %282 = arith.select %279, %281, %277 : vector<2x256xi1>, vector<2x256xf32>
    %c56_i32 = arith.constant 56 : i32
    %283 = vector.broadcast %c56_i32 : i32 to vector<2x256xi32>
    %284 = arith.cmpi eq, %0, %283 : vector<2x256xi32>
    %c56 = arith.constant 56 : index
    %285 = memref.load %arg0[%c56] : memref<64xf32, #tpu.memory_space<smem>>
    %286 = vector.broadcast %285 : f32 to vector<2x256xf32>
    %287 = arith.select %284, %286, %282 : vector<2x256xi1>, vector<2x256xf32>
    %c57_i32 = arith.constant 57 : i32
    %288 = vector.broadcast %c57_i32 : i32 to vector<2x256xi32>
    %289 = arith.cmpi eq, %0, %288 : vector<2x256xi32>
    %c57 = arith.constant 57 : index
    %290 = memref.load %arg0[%c57] : memref<64xf32, #tpu.memory_space<smem>>
    %291 = vector.broadcast %290 : f32 to vector<2x256xf32>
    %292 = arith.select %289, %291, %287 : vector<2x256xi1>, vector<2x256xf32>
    %c58_i32 = arith.constant 58 : i32
    %293 = vector.broadcast %c58_i32 : i32 to vector<2x256xi32>
    %294 = arith.cmpi eq, %0, %293 : vector<2x256xi32>
    %c58 = arith.constant 58 : index
    %295 = memref.load %arg0[%c58] : memref<64xf32, #tpu.memory_space<smem>>
    %296 = vector.broadcast %295 : f32 to vector<2x256xf32>
    %297 = arith.select %294, %296, %292 : vector<2x256xi1>, vector<2x256xf32>
    %c59_i32 = arith.constant 59 : i32
    %298 = vector.broadcast %c59_i32 : i32 to vector<2x256xi32>
    %299 = arith.cmpi eq, %0, %298 : vector<2x256xi32>
    %c59 = arith.constant 59 : index
    %300 = memref.load %arg0[%c59] : memref<64xf32, #tpu.memory_space<smem>>
    %301 = vector.broadcast %300 : f32 to vector<2x256xf32>
    %302 = arith.select %299, %301, %297 : vector<2x256xi1>, vector<2x256xf32>
    %c60_i32 = arith.constant 60 : i32
    %303 = vector.broadcast %c60_i32 : i32 to vector<2x256xi32>
    %304 = arith.cmpi eq, %0, %303 : vector<2x256xi32>
    %c60 = arith.constant 60 : index
    %305 = memref.load %arg0[%c60] : memref<64xf32, #tpu.memory_space<smem>>
    %306 = vector.broadcast %305 : f32 to vector<2x256xf32>
    %307 = arith.select %304, %306, %302 : vector<2x256xi1>, vector<2x256xf32>
    %c61_i32 = arith.constant 61 : i32
    %308 = vector.broadcast %c61_i32 : i32 to vector<2x256xi32>
    %309 = arith.cmpi eq, %0, %308 : vector<2x256xi32>
    %c61 = arith.constant 61 : index
    %310 = memref.load %arg0[%c61] : memref<64xf32, #tpu.memory_space<smem>>
    %311 = vector.broadcast %310 : f32 to vector<2x256xf32>
    %312 = arith.select %309, %311, %307 : vector<2x256xi1>, vector<2x256xf32>
    %c62_i32 = arith.constant 62 : i32
    %313 = vector.broadcast %c62_i32 : i32 to vector<2x256xi32>
    %314 = arith.cmpi eq, %0, %313 : vector<2x256xi32>
    %c62 = arith.constant 62 : index
    %315 = memref.load %arg0[%c62] : memref<64xf32, #tpu.memory_space<smem>>
    %316 = vector.broadcast %315 : f32 to vector<2x256xf32>
    %317 = arith.select %314, %316, %312 : vector<2x256xi1>, vector<2x256xf32>
    %c63_i32 = arith.constant 63 : i32
    %318 = vector.broadcast %c63_i32 : i32 to vector<2x256xi32>
    %319 = arith.cmpi eq, %0, %318 : vector<2x256xi32>
    %c63 = arith.constant 63 : index
    %320 = memref.load %arg0[%c63] : memref<64xf32, #tpu.memory_space<smem>>
    %321 = vector.broadcast %320 : f32 to vector<2x256xf32>
    %322 = arith.select %319, %321, %317 : vector<2x256xi1>, vector<2x256xf32>
    %323 = tpu.iota {dimensions = array<i32: 1>} : vector<2x256xi32>
    %c204_i32 = arith.constant 204 : i32
    %324 = vector.broadcast %c204_i32 : i32 to vector<2x256xi32>
    %325 = arith.cmpi eq, %323, %324 : vector<2x256xi32>
    %326 = arith.extui %325 : vector<2x256xi1> to vector<2x256xi32>
    %327 = arith.sitofp %326 : vector<2x256xi32> to vector<2x256xf32>
    %328 = arith.mulf %322, %1 : vector<2x256xf32>
    %329 = arith.addf %328, %327 : vector<2x256xf32>
    %330 = arith.truncf %329 : vector<2x256xf32> to vector<2x256xbf16>
    %c0_4 = arith.constant 0 : index
    %c0_5 = arith.constant 0 : index
    %331 = vector.load %arg3[%c0_4, %c0_5] : memref<256x128xbf16, #tpu.memory_space<vmem>>, vector<256x128xbf16>
    %cst_6 = arith.constant dense<0.000000e+00> : vector<2x128xf32>
    %332 = tpu.matmul %330, %331, %cst_6 {dimension_numbers = #tpu.dot_dimension_numbers<[1], [0], [0], [1], [0, 0, 1, 1], [], []>} : vector<2x256xbf16>, vector<256x128xbf16>, vector<2x128xf32> -> vector<2x128xf32>
    %c0_7 = arith.constant 0 : index
    %c0_8 = arith.constant 0 : index
    %333 = vector.load %arg4[%c0_7, %c0_8] : memref<2x128xf32, #tpu.memory_space<vmem>>, vector<2x128xf32>
    tpu.vector_store %arg4[%c0_7, %c0_8], %332 {strides = array<i32>} : memref<2x128xf32, #tpu.memory_space<vmem>>, vector<2x128xf32>,
    return
  }
}

</mosaic_0001>

<llo_original>
// kernel: custom_model_forward.1
$region0: #{custom_model_forward.1}
  #allocation0 [shape = 'u32[]', space=smem, size = 0x4, offset = 0x4, fixed_abs, tag = 'smem constant byte address 0x4 - core index']
  #allocation1 [shape = 'u32[72,128]{1,0:T(1,128)}', space=vmem, size = 0x9000, scoped, tag = 'internal scratch']
  %s0 = inlined_call_operand.vmem [shape: f32[64], index: 0, kind: input, shape index: {}]
  %s1 = inlined_call_operand.vmem [shape: s32[2,256], index: 1, kind: input, shape index: {}]
  %s2 = inlined_call_operand.vmem [shape: f32[2,256], index: 2, kind: input, shape index: {}]
  %s3 = inlined_call_operand.hbm [shape: bf16[256,128], index: 3, kind: input, shape index: {}]
  %s4 = inlined_call_operand.hbm [shape: f32[2,128], index: 4, kind: output, shape index: {}]
  %s5 = sld [smem:[#allocation0]]
  $region34: #{custom_model_forward.1} parent=0
    _
  %s7 = ssub.s32 1, %s5
  %s8 = scalar_select 0, %s7, %s5
  $region1: #{custom_model_forward.1} parent=0
    #allocation2 [shape = 'u8[512]{0}', space=smem, size = 0x200, scoped, tag = 'input window, operand 0, single buffered']
    #allocation3 [shape = 's32[1]{0}', space=sflag, size = 0x4, scoped, tag = 'scoped memory for custom_model_forward.1']
    #allocation4 [shape = 's32[1]{0}', space=sflag, size = 0x4, scoped, tag = 'scoped memory for custom_model_forward.1']
    #allocation5 [shape = 's32[1]{0}', space=sflag, size = 0x4, scoped, tag = 'scoped memory for custom_model_forward.1']
    #allocation6 [shape = 'u8[65536]{0}', space=vmem, size = 0x10000, scoped, tag = 'input window, operand 3, single buffered']
    #allocation7 [shape = 'u8[1024]{0}', space=vmem, size = 0x400, scoped, tag = 'output window, operand 0, single buffered']
    %9 = vsyncpa [#allocation5], 0
    %10 = vsyncpa [#allocation3], 0
    %11 = vsyncpa [#allocation4], 0
    // Predicated region
    $region2: #{custom_model_forward.1} parent=1 // pred_check
      _
    $region3: #{custom_model_forward.1} parent=1 // pred_check_branch
      %13 = sbr.rel (0) target = $region5
    $region4: #{custom_model_forward.1} parent=1 // pred_region
      %15 = vsyncadd [#allocation5], 0
      %s17 = sshll.u32 %s0, 4
      %s18 = int_to_ptr.vmem [resolvable:$true] %s17
      %20 = dma.vmem_to_smem %s18, 16, [#allocation2], [#allocation5]
    $region5: #{custom_model_forward.1} parent=1 // pred_fallthru
      _
    // Predicated region
    $region6: #{custom_model_forward.1} parent=1 // pred_check
      _
    $region7: #{custom_model_forward.1} parent=1 // pred_check_branch
      %22 = sbr.rel (0) target = $region9
    $region8: #{custom_model_forward.1} parent=1 // pred_region
      _
    $region9: #{custom_model_forward.1} parent=1 // pred_fallthru
      _
    // Predicated region
    $region10: #{custom_model_forward.1} parent=1 // pred_check
      _
    $region11: #{custom_model_forward.1} parent=1 // pred_check_branch
      %24 = sbr.rel (0) target = $region13
    $region12: #{custom_model_forward.1} parent=1 // pred_region
      _
    $region13: #{custom_model_forward.1} parent=1 // pred_fallthru
      _
    // Predicated region
    $region14: #{custom_model_forward.1} parent=1 // pred_check
      _
    $region15: #{custom_model_forward.1} parent=1 // pred_check_branch
      %26 = sbr.rel (0) target = $region17
    $region16: #{custom_model_forward.1} parent=1 // pred_region
      %28 = vsyncadd [#allocation3], 0
      %s29 = sshll.u32 %s3, 4
      %s30 = int_to_ptr.hbm [resolvable:$true] %s29
      %s31 = sshll.u32 [#allocation6], 4
      %s32 = int_to_ptr.vmem [resolvable:$true] %s31
      %37 = dma.hbm_to_vmem [thread:$0]  %s30, 2048, %s32, [#allocation3], 64, 64, 4
    $region17: #{custom_model_forward.1} parent=1 // pred_fallthru
      _
    // Predicated region
    $region18: #{custom_model_forward.1} parent=1 // pred_check
      _
    $region19: #{custom_model_forward.1} parent=1 // pred_check_branch
      %39 = sbr.rel (0) target = $region21
    $region20: #{custom_model_forward.1} parent=1 // pred_region
      %41 = dma.done [#allocation5], 16
    $region21: #{custom_model_forward.1} parent=1 // pred_fallthru
      _
    // Predicated region
    $region22: #{custom_model_forward.1} parent=1 // pred_check
      _
    $region23: #{custom_model_forward.1} parent=1 // pred_check_branch
      %43 = sbr.rel (0) target = $region25
    $region24: #{custom_model_forward.1} parent=1 // pred_region
      %45 = dma.done [#allocation3], 2048
    $region25: #{custom_model_forward.1} parent=1 // pred_fallthru
      _
    %46 = sfence
    %v47 = vld [vmem:[%s1] sm:$0xf]
    %v48 = vld [vmem:[%s2] sm:$0xf]
    %vm49 = vcmp.eq.s32.totalorder %v47, 0
    %s50 = sld [smem:[#allocation2]]
    %v51 = vstv %s50
    %v52 = vsel %vm49, %v51, 0.0
    %vm53 = vcmp.eq.s32.totalorder %v47, 1
    %s54 = sld [smem:[#allocation2 + $0x1]]
    %v55 = vstv %s54
    %v56 = vsel %vm53, %v55, %v52
    %vm57 = vcmp.eq.s32.totalorder %v47, 2
    %s58 = sld [smem:[#allocation2 + $0x2]]
    %v59 = vstv %s58
    %v60 = vsel %vm57, %v59, %v56
    %vm61 = vcmp.eq.s32.totalorder %v47, 3
    %s62 = sld [smem:[#allocation2 + $0x3]]
    %v63 = vstv %s62
    %v64 = vsel %vm61, %v63, %v60
    %vm65 = vcmp.eq.s32.totalorder %v47, 4
    %s66 = sld [smem:[#allocation2 + $0x4]]
    %v67 = vstv %s66
    %v68 = vsel %vm65, %v67, %v64
    %vm69 = vcmp.eq.s32.totalorder %v47, 5
    %s70 = sld [smem:[#allocation2 + $0x5]]
    %v71 = vstv %s70
    %v72 = vsel %vm69, %v71, %v68
    %vm73 = vcmp.eq.s32.totalorder %v47, 6
    %s74 = sld [smem:[#allocation2 + $0x6]]
    %v75 = vstv %s74
    %v76 = vsel %vm73, %v75, %v72
    %vm77 = vcmp.eq.s32.totalorder %v47, 7
    %s78 = sld [smem:[#allocation2 + $0x7]]
    %v79 = vstv %s78
    %v80 = vsel %vm77, %v79, %v76
    %vm81 = vcmp.eq.s32.totalorder %v47, 8
    %s82 = sld [smem:[#allocation2 + $0x8]]
    %v83 = vstv %s82
    %v84 = vsel %vm81, %v83, %v80
    %vm85 = vcmp.eq.s32.totalorder %v47, 9
    %s86 = sld [smem:[#allocation2 + $0x9]]
    %v87 = vstv %s86
    %v88 = vsel %vm85, %v87, %v84
    %vm89 = vcmp.eq.s32.totalorder %v47, 10
    %s90 = sld [smem:[#allocation2 + $0xa]]
    %v91 = vstv %s90
    %v92 = vsel %vm89, %v91, %v88
    %vm93 = vcmp.eq.s32.totalorder %v47, 11
    %s94 = sld [smem:[#allocation2 + $0xb]]
    %v95 = vstv %s94
    %v96 = vsel %vm93, %v95, %v92
    %vm97 = vcmp.eq.s32.totalorder %v47, 12
    %s98 = sld [smem:[#allocation2 + $0xc]]
    %v99 = vstv %s98
    %v100 = vsel %vm97, %v99, %v96
    %vm101 = vcmp.eq.s32.totalorder %v47, 13
    %s102 = sld [smem:[#allocation2 + $0xd]]
    %v103 = vstv %s102
    %v104 = vsel %vm101, %v103, %v100
    %vm105 = vcmp.eq.s32.totalorder %v47, 14
    %s106 = sld [smem:[#allocation2 + $0xe]]
    %v107 = vstv %s106
    %v108 = vsel %vm105, %v107, %v104
    %vm109 = vcmp.eq.s32.totalorder %v47, 15
    %s110 = sld [smem:[#allocation2 + $0xf]]
    %v111 = vstv %s110
    %v112 = vsel %vm109, %v111, %v108
    %vm113 = vcmp.eq.s32.totalorder %v47, 16
    %s114 = sld [smem:[#allocation2 + $0x10]]
    %v115 = vstv %s114
    %v116 = vsel %vm113, %v115, %v112
    %vm117 = vcmp.eq.s32.totalorder %v47, 17
    %s118 = sld [smem:[#allocation2 + $0x11]]
    %v119 = vstv %s118
    %v120 = vsel %vm117, %v119, %v116
    %vm121 = vcmp.eq.s32.totalorder %v47, 18
    %s122 = sld [smem:[#allocation2 + $0x12]]
    %v123 = vstv %s122
    %v124 = vsel %vm121, %v123, %v120
    %vm125 = vcmp.eq.s32.totalorder %v47, 19
    %s126 = sld [smem:[#allocation2 + $0x13]]
    %v127 = vstv %s126
    %v128 = vsel %vm125, %v127, %v124
    %vm129 = vcmp.eq.s32.totalorder %v47, 20
    %s130 = sld [smem:[#allocation2 + $0x14]]
    %v131 = vstv %s130
    %v132 = vsel %vm129, %v131, %v128
    %vm133 = vcmp.eq.s32.totalorder %v47, 21
    %s134 = sld [smem:[#allocation2 + $0x15]]
    %v135 = vstv %s134
    %v136 = vsel %vm133, %v135, %v132
    %vm137 = vcmp.eq.s32.totalorder %v47, 22
    %s138 = sld [smem:[#allocation2 + $0x16]]
    %v139 = vstv %s138
    %v140 = vsel %vm137, %v139, %v136
    %vm141 = vcmp.eq.s32.totalorder %v47, 23
    %s142 = sld [smem:[#allocation2 + $0x17]]
    %v143 = vstv %s142
    %v144 = vsel %vm141, %v143, %v140
    %vm145 = vcmp.eq.s32.totalorder %v47, 24
    %s146 = sld [smem:[#allocation2 + $0x18]]
    %v147 = vstv %s146
    %v148 = vsel %vm145, %v147, %v144
    %vm149 = vcmp.eq.s32.totalorder %v47, 25
    %s150 = sld [smem:[#allocation2 + $0x19]]
    %v151 = vstv %s150
    %v152 = vsel %vm149, %v151, %v148
    %vm153 = vcmp.eq.s32.totalorder %v47, 26
    %s154 = sld [smem:[#allocation2 + $0x1a]]
    %v155 = vstv %s154
    %v156 = vsel %vm153, %v155, %v152
    %vm157 = vcmp.eq.s32.totalorder %v47, 27
    %s158 = sld [smem:[#allocation2 + $0x1b]]
    %v159 = vstv %s158
    %v160 = vsel %vm157, %v159, %v156
    %vm161 = vcmp.eq.s32.totalorder %v47, 28
    %s162 = sld [smem:[#allocation2 + $0x1c]]
    %v163 = vstv %s162
    %v164 = vsel %vm161, %v163, %v160
    %vm165 = vcmp.eq.s32.totalorder %v47, 29
    %s166 = sld [smem:[#allocation2 + $0x1d]]
    %v167 = vstv %s166
    %v168 = vsel %vm165, %v167, %v164
    %vm169 = vcmp.eq.s32.totalorder %v47, 30
    %s170 = sld [smem:[#allocation2 + $0x1e]]
    %v171 = vstv %s170
    %v172 = vsel %vm169, %v171, %v168
    %vm173 = vcmp.eq.s32.totalorder %v47, 31
    %s174 = sld [smem:[#allocation2 + $0x1f]]
    %v175 = vstv %s174
    %v176 = vsel %vm173, %v175, %v172
    %vm177 = vcmp.eq.s32.totalorder %v47, 32
    %s178 = sld [smem:[#allocation2 + $0x20]]
    %v179 = vstv %s178
    %v180 = vsel %vm177, %v179, %v176
    %vm181 = vcmp.eq.s32.totalorder %v47, 33
    %s182 = sld [smem:[#allocation2 + $0x21]]
    %v183 = vstv %s182
    %v184 = vsel %vm181, %v183, %v180
    %vm185 = vcmp.eq.s32.totalorder %v47, 34
    %s186 = sld [smem:[#allocation2 + $0x22]]
    %v187 = vstv %s186
    %v188 = vsel %vm185, %v187, %v184
    %vm189 = vcmp.eq.s32.totalorder %v47, 35
    %s190 = sld [smem:[#allocation2 + $0x23]]
    %v191 = vstv %s190
    %v192 = vsel %vm189, %v191, %v188
    %vm193 = vcmp.eq.s32.totalorder %v47, 36
    %s194 = sld [smem:[#allocation2 + $0x24]]
    %v195 = vstv %s194
    %v196 = vsel %vm193, %v195, %v192
    %vm197 = vcmp.eq.s32.totalorder %v47, 37
    %s198 = sld [smem:[#allocation2 + $0x25]]
    %v199 = vstv %s198
    %v200 = vsel %vm197, %v199, %v196
    %vm201 = vcmp.eq.s32.totalorder %v47, 38
    %s202 = sld [smem:[#allocation2 + $0x26]]
    %v203 = vstv %s202
    %v204 = vsel %vm201, %v203, %v200
    %vm205 = vcmp.eq.s32.totalorder %v47, 39
    %s206 = sld [smem:[#allocation2 + $0x27]]
    %v207 = vstv %s206
    %v208 = vsel %vm205, %v207, %v204
    %vm209 = vcmp.eq.s32.totalorder %v47, 40
    %s210 = sld [smem:[#allocation2 + $0x28]]
    %v211 = vstv %s210
    %v212 = vsel %vm209, %v211, %v208
    %vm213 = vcmp.eq.s32.totalorder %v47, 41
    %s214 = sld [smem:[#allocation2 + $0x29]]
    %v215 = vstv %s214
    %v216 = vsel %vm213, %v215, %v212
    %vm217 = vcmp.eq.s32.totalorder %v47, 42
    %s218 = sld [smem:[#allocation2 + $0x2a]]
    %v219 = vstv %s218
    %v220 = vsel %vm217, %v219, %v216
    %vm221 = vcmp.eq.s32.totalorder %v47, 43
    %s222 = sld [smem:[#allocation2 + $0x2b]]
    %v223 = vstv %s222
    %v224 = vsel %vm221, %v223, %v220
    %vm225 = vcmp.eq.s32.totalorder %v47, 44
    %s226 = sld [smem:[#allocation2 + $0x2c]]
    %v227 = vstv %s226
    %v228 = vsel %vm225, %v227, %v224
    %vm229 = vcmp.eq.s32.totalorder %v47, 45
    %s230 = sld [smem:[#allocation2 + $0x2d]]
    %v231 = vstv %s230
    %v232 = vsel %vm229, %v231, %v228
    %vm233 = vcmp.eq.s32.totalorder %v47, 46
    %s234 = sld [smem:[#allocation2 + $0x2e]]
    %v235 = vstv %s234
    %v236 = vsel %vm233, %v235, %v232
    %vm237 = vcmp.eq.s32.totalorder %v47, 47
    %s238 = sld [smem:[#allocation2 + $0x2f]]
    %v239 = vstv %s238
    %v240 = vsel %vm237, %v239, %v236
    %vm241 = vcmp.eq.s32.totalorder %v47, 48
    %s242 = sld [smem:[#allocation2 + $0x30]]
    %v243 = vstv %s242
    %v244 = vsel %vm241, %v243, %v240
    %vm245 = vcmp.eq.s32.totalorder %v47, 49
    %s246 = sld [smem:[#allocation2 + $0x31]]
    %v247 = vstv %s246
    %v248 = vsel %vm245, %v247, %v244
    %vm249 = vcmp.eq.s32.totalorder %v47, 50
    %s250 = sld [smem:[#allocation2 + $0x32]]
    %v251 = vstv %s250
    %v252 = vsel %vm249, %v251, %v248
    %vm253 = vcmp.eq.s32.totalorder %v47, 51
    %s254 = sld [smem:[#allocation2 + $0x33]]
    %v255 = vstv %s254
    %v256 = vsel %vm253, %v255, %v252
    %vm257 = vcmp.eq.s32.totalorder %v47, 52
    %s258 = sld [smem:[#allocation2 + $0x34]]
    %v259 = vstv %s258
    %v260 = vsel %vm257, %v259, %v256
    %vm261 = vcmp.eq.s32.totalorder %v47, 53
    %s262 = sld [smem:[#allocation2 + $0x35]]
    %v263 = vstv %s262
    %v264 = vsel %vm261, %v263, %v260
    %vm265 = vcmp.eq.s32.totalorder %v47, 54
    %s266 = sld [smem:[#allocation2 + $0x36]]
    %v267 = vstv %s266
    %v268 = vsel %vm265, %v267, %v264
    %vm269 = vcmp.eq.s32.totalorder %v47, 55
    %s270 = sld [smem:[#allocation2 + $0x37]]
    %v271 = vstv %s270
    %v272 = vsel %vm269, %v271, %v268
    %vm273 = vcmp.eq.s32.totalorder %v47, 56
    %s274 = sld [smem:[#allocation2 + $0x38]]
    %v275 = vstv %s274
    %v276 = vsel %vm273, %v275, %v272
    %vm277 = vcmp.eq.s32.totalorder %v47, 57
    %s278 = sld [smem:[#allocation2 + $0x39]]
    %v279 = vstv %s278
    %v280 = vsel %vm277, %v279, %v276
    %vm281 = vcmp.eq.s32.totalorder %v47, 58
    %s282 = sld [smem:[#allocation2 + $0x3a]]
    %v283 = vstv %s282
    %v284 = vsel %vm281, %v283, %v280
    %vm285 = vcmp.eq.s32.totalorder %v47, 59
    %s286 = sld [smem:[#allocation2 + $0x3b]]
    %v287 = vstv %s286
    %v288 = vsel %vm285, %v287, %v284
    %vm289 = vcmp.eq.s32.totalorder %v47, 60
    %s290 = sld [smem:[#allocation2 + $0x3c]]
    %v291 = vstv %s290
    %v292 = vsel %vm289, %v291, %v288
    %vm293 = vcmp.eq.s32.totalorder %v47, 61
    %s294 = sld [smem:[#allocation2 + $0x3d]]
    %v295 = vstv %s294
    %v296 = vsel %vm293, %v295, %v292
    %vm297 = vcmp.eq.s32.totalorder %v47, 62
    %s298 = sld [smem:[#allocation2 + $0x3e]]
    %v299 = vstv %s298
    %v300 = vsel %vm297, %v299, %v296
    %vm301 = vcmp.eq.s32.totalorder %v47, 63
    %s302 = sld [smem:[#allocation2 + $0x3f]]
    %v303 = vstv %s302
    %v304 = vsel %vm301, %v303, %v300
    %v305 = vlaneseq
    %v306 = vand.u32 %v305, 127
    %v307 = vadd.s32 %v306, 128
    %vm308 = vcmp.eq.s32.totalorder %v306, 204
    %vm309 = vcmp.eq.s32.totalorder %v307, 204
    %v310 = vsel %vm308, 1, 0
    %v311 = vsel %vm309, 1, 0
    %v312 = vcvt.s32.f32 %v310
    %v313 = vcvt.s32.f32 %v311
    %v314 = vmul.f32 %v304, %v48
    %v317 = vrot.slane %v313, 6
    %vm318 = vcmask 1041408
    %v319 = vsel %vm318, %v312, %v317
    %v321 = vadd.f32 %v314, %v319
    %323 = vst [vmem:[#allocation1] ss:$4 sm:$0xff] %v321
    %v324 = vld.sshfl [vmem:[#allocation1] sm:$0xff pattern:$0x73625140]
    %v325 = vld.sshfl [vmem:[#allocation1 + $0x8] sm:$0xff pattern:$0x73625140]
    %v328 = vpack.c.bf16 %v324, %v324
    %v329 = vpack.c.bf16 %v325, %v325
    %v330 = vld [vmem:[#allocation6] sm:$0xf]
    %v331 = vld [vmem:[#allocation6 + $0x4] sm:$0xf]
    %v332 = vld [vmem:[#allocation6 + $0x8] sm:$0xf]
    %v333 = vld [vmem:[#allocation6 + $0xc] sm:$0xf]
    %v334 = vld [vmem:[#allocation6 + $0x10] sm:$0xf]
    %v335 = vld [vmem:[#allocation6 + $0x14] sm:$0xf]
    %v336 = vld [vmem:[#allocation6 + $0x18] sm:$0xf]
    %v337 = vld [vmem:[#allocation6 + $0x1c] sm:$0xf]
    %v338 = vld [vmem:[#allocation6 + $0x20] sm:$0xf]
    %v339 = vld [vmem:[#allocation6 + $0x24] sm:$0xf]
    %v340 = vld [vmem:[#allocation6 + $0x28] sm:$0xf]
    %v341 = vld [vmem:[#allocation6 + $0x2c] sm:$0xf]
    %v342 = vld [vmem:[#allocation6 + $0x30] sm:$0xf]
    %v343 = vld [vmem:[#allocation6 + $0x34] sm:$0xf]
    %v344 = vld [vmem:[#allocation6 + $0x38] sm:$0xf]
    %v345 = vld [vmem:[#allocation6 + $0x3c] sm:$0xf]
    %v346 = vld [vmem:[#allocation6 + $0x40] sm:$0xf]
    %v347 = vld [vmem:[#allocation6 + $0x44] sm:$0xf]
    %v348 = vld [vmem:[#allocation6 + $0x48] sm:$0xf]
    %v349 = vld [vmem:[#allocation6 + $0x4c] sm:$0xf]
    %v350 = vld [vmem:[#allocation6 + $0x50] sm:$0xf]
    %v351 = vld [vmem:[#allocation6 + $0x54] sm:$0xf]
    %v352 = vld [vmem:[#allocation6 + $0x58] sm:$0xf]
    %v353 = vld [vmem:[#allocation6 + $0x5c] sm:$0xf]
    %v354 = vld [vmem:[#allocation6 + $0x60] sm:$0xf]
    %v355 = vld [vmem:[#allocation6 + $0x64] sm:$0xf]
    %v356 = vld [vmem:[#allocation6 + $0x68] sm:$0xf]
    %v357 = vld [vmem:[#allocation6 + $0x6c] sm:$0xf]
    %v358 = vld [vmem:[#allocation6 + $0x70] sm:$0xf]
    %v359 = vld [vmem:[#allocation6 + $0x74] sm:$0xf]
    %v360 = vld [vmem:[#allocation6 + $0x78] sm:$0xf]
    %v361 = vld [vmem:[#allocation6 + $0x7c] sm:$0xf]
    %v394 = vunpack.c.l.b16 %v330
    %v395 = vunpack.c.l.b16 %v331
    %v396 = vunpack.c.l.b16 %v332
    %v397 = vunpack.c.l.b16 %v333
    %v398 = vunpack.c.l.b16 %v334
    %v399 = vunpack.c.l.b16 %v335
    %v400 = vunpack.c.l.b16 %v336
    %v401 = vunpack.c.l.b16 %v337
    %v402 = vunpack.c.l.b16 %v338
    %v403 = vunpack.c.l.b16 %v339
    %v404 = vunpack.c.l.b16 %v340
    %v405 = vunpack.c.l.b16 %v341
    %v406 = vunpack.c.l.b16 %v342
    %v407 = vunpack.c.l.b16 %v343
    %v408 = vunpack.c.l.b16 %v344
    %v409 = vunpack.c.l.b16 %v345
    %v410 = vunpack.c.l.b16 %v346
    %v411 = vunpack.c.l.b16 %v347
    %v412 = vunpack.c.l.b16 %v348
    %v413 = vunpack.c.l.b16 %v349
    %v414 = vunpack.c.l.b16 %v350
    %v415 = vunpack.c.l.b16 %v351
    %v416 = vunpack.c.l.b16 %v352
    %v417 = vunpack.c.l.b16 %v353
    %v418 = vunpack.c.l.b16 %v354
    %v419 = vunpack.c.l.b16 %v355
    %v420 = vunpack.c.l.b16 %v356
    %v421 = vunpack.c.l.b16 %v357
    %v422 = vunpack.c.l.b16 %v358
    %v423 = vunpack.c.l.b16 %v359
    %v424 = vunpack.c.l.b16 %v360
    %v425 = vunpack.c.l.b16 %v361
    %v426 = vpack.c.b16 %v395, %v394
    %v427 = vpack.c.b16 %v397, %v396
    %v428 = vpack.c.b16 %v399, %v398
    %v429 = vpack.c.b16 %v401, %v400
    %v430 = vpack.c.b16 %v403, %v402
    %v431 = vpack.c.b16 %v405, %v404
    %v432 = vpack.c.b16 %v407, %v406
    %v433 = vpack.c.b16 %v409, %v408
    %v434 = vpack.c.b16 %v411, %v410
    %v435 = vpack.c.b16 %v413, %v412
    %v436 = vpack.c.b16 %v415, %v414
    %v437 = vpack.c.b16 %v417, %v416
    %v438 = vpack.c.b16 %v419, %v418
    %v439 = vpack.c.b16 %v421, %v420
    %v440 = vpack.c.b16 %v423, %v422
    %v441 = vpack.c.b16 %v425, %v424
    %458 = vmatpush.bf16.msra.mxu0 %v433
    %459 = vmatpush.bf16.msra.mxu0 %v432
    %460 = vmatpush.bf16.msra.mxu0 %v431
    %461 = vmatpush.bf16.msra.mxu0 %v430
    %462 = vmatpush.bf16.msra.mxu0 %v429
    %463 = vmatpush.bf16.msra.mxu0 %v428
    %464 = vmatpush.bf16.msra.mxu0 %v427
    %465 = vmatpush.bf16.msra.mxu0 %v426
    %466 = vmatmul.bf16.gmra.mxu0 %v328
    %v467 = vpop.f32.mrf.mxu0
    %v468 = vadd.f32 0.0, %v467
    %v469 = vpop.f32.mrf.mxu0
    %470 = vdwg.mxu0
    %471 = vmatpush.bf16.msra.mxu0 %v441
    %472 = vmatpush.bf16.msra.mxu0 %v440
    %473 = vmatpush.bf16.msra.mxu0 %v439
    %474 = vmatpush.bf16.msra.mxu0 %v438
    %475 = vmatpush.bf16.msra.mxu0 %v437
    %476 = vmatpush.bf16.msra.mxu0 %v436
    %477 = vmatpush.bf16.msra.mxu0 %v435
    %478 = vmatpush.bf16.msra.mxu0 %v434
    %479 = vmatmul.bf16.gmra.mxu0 %v329
    %v480 = vpop.f32.mrf.mxu0
    %v481 = vadd.f32 %v468, %v480
    %v482 = vpop.f32.mrf.mxu0
    %483 = vdwg.mxu0
    %484 = vst [vmem:[#allocation7] sm:$0x3] %v481
    // Predicated region
    $region26: #{custom_model_forward.1} parent=1 // pred_check
      _
    $region27: #{custom_model_forward.1} parent=1 // pred_check_branch
      %486 = sbr.rel (0) target = $region29
    $region28: #{custom_model_forward.1} parent=1 // pred_region
      %488 = vsyncadd [#allocation4], 0
      %s490 = sshll.u32 [#allocation7], 4
      %s491 = int_to_ptr.vmem [resolvable:$true] %s490
      %s492 = sshll.u32 %s4, 4
      %s493 = int_to_ptr.hbm [resolvable:$true] %s492
      %495 = dma.vmem_to_hbm [thread:$0]  %s491, 32, %s493, [#allocation4]
    $region29: #{custom_model_forward.1} parent=1 // pred_fallthru
      _
    // Predicated region
    $region30: #{custom_model_forward.1} parent=1 // pred_check
      _
    $region31: #{custom_model_forward.1} parent=1 // pred_check_branch
      %497 = sbr.rel (0) target = $region33
    $region32: #{custom_model_forward.1} parent=1 // pred_region
      %499 = dma.done [#allocation4], 32
    $region33: #{custom_model_forward.1} parent=1 // pred_fallthru
      _
    %500 = vsyncpa [#allocation3], 1
    %501 = vsyncpa [#allocation4], 1
    %502 = vsyncpa [#allocation5], 1

</llo_original>
